<compile_context>
chip_gen: v5e
topology: v5e:2x2
jax: 0.10.0
libtpu: 0.0.40
codegen_flags: <defaults>
</compile_context>

<pallas_src>
import jax
import jax.numpy as jnp
from jax.experimental import pallas as pl
from jax.experimental.pallas import tpu as pltpu

_TARGET_IN_BLOCK_BYTES = 2 * 1024 * 1024  # ~2 MiB input tile -> ~5 MiB double-buffered


def _maxpool2x2_kernel(x_ref, o_ref):
    # x_ref: (THO, 2, Wo, 2*C)   o_ref: (THO, Wo, C)
    c = o_ref.shape[-1]
    # Fold the W-pair (two contiguous C-halves of the lane dim) of window-row 0 first,
    # so the large (..,2C) slab is dead before window-row 1 is loaded.
    r0 = x_ref[:, 0]                                    # (THO, Wo, 2C)
    h0 = jnp.maximum(r0[..., :c], r0[..., c:])          # (THO, Wo, C)
    r1 = x_ref[:, 1]
    h1 = jnp.maximum(r1[..., :c], r1[..., c:])
    o_ref[...] = jnp.maximum(h0, h1)                    # fold the H-pair


def _pick_tile(ho, wo, c, itemsize):
    """Largest THO dividing Ho with input block <= ~2 MiB."""
    per_row = 4 * wo * c * itemsize          # input bytes per output row
    tho = max(1, min(ho, _TARGET_IN_BLOCK_BYTES // per_row))
    while ho % tho:                          # Ho is a power of two in UNet; terminates fast
        tho -= 1
    return tho


def maxpool2x2_nhwc(x):
    """MaxPool2d(2) on an NHWC tensor. Zero transposes: free reshapes + one kernel."""
    n, h, w, c = x.shape
    ho, wo = h // 2, w // 2
    if (h % 2) or (w % 2):                   # PyTorch floor mode: drop trailing row/col
        x = x[:, : 2 * ho, : 2 * wo, :]
    # Free reshape: (N, H, W, C) -> (N, Ho, 2, Wo, 2*C).
    xw = x.reshape(n, ho, 2, wo, 2 * c)

    tho = _pick_tile(ho, wo, c, x.dtype.itemsize)
    grid = (n, ho // tho)

    return pl.pallas_call(
        _maxpool2x2_kernel,
        out_shape=jax.ShapeDtypeStruct((n, ho, wo, c), x.dtype),
        grid=grid,
        in_specs=[
            pl.BlockSpec((None, tho, 2, wo, 2 * c), lambda b, i: (b, i, 0, 0, 0)),
        ],
        out_specs=pl.BlockSpec((None, tho, wo, c), lambda b, i: (b, i, 0, 0)),
        compiler_params=pltpu.CompilerParams(
            dimension_semantics=("parallel", "parallel")
        ),
    )(xw)


def downsample(x):
    """DownSample.forward: nn.MaxPool2d(2) on an NCHW tensor (PyTorch parity adapter).

    The Pallas kernel itself is NHWC-native; keep UNet activations in NHWC and call
    maxpool2x2_nhwc directly to eliminate these two transposes entirely.
    """
    y = maxpool2x2_nhwc(jnp.transpose(x, (0, 2, 3, 1)))   # NCHW -> NHWC
    return jnp.transpose(y, (0, 3, 1, 2))                  # NHWC -> NCHW


if __name__ == "__main__":
    key0, key1 = jax.random.split(jax.random.PRNGKey(0))

    # 1) Small NCHW test matching the PyTorch module interface.
    N, C, H, W = 2, 4, 16, 16
    x = jax.random.normal(key0, (N, C, H, W), dtype=jnp.float32)
    y = jax.block_until_ready(downsample(x))
    y_ref = x.reshape(N, C, H // 2, 2, W // 2, 2).max(axis=(3, 5))
    assert y.shape == (N, C, H // 2, W // 2), y.shape
    assert y.dtype == x.dtype
    assert jnp.allclose(y, y_ref), "Pallas maxpool (NCHW adapter) mismatch"

    # 2) UNet-realistic NHWC case: C >= 64 (lane-dense), multiple Ho tiles on the grid.
    n2, h2, w2, c2 = 2, 128, 128, 64
    x2 = jax.random.normal(key1, (n2, h2, w2, c2), dtype=jnp.float32)
    y2 = jax.block_until_ready(maxpool2x2_nhwc(x2))
    y2_ref = x2.reshape(n2, h2 // 2, 2, w2 // 2, 2, c2).max(axis=(2, 4))
    assert y2.shape == (n2, h2 // 2, w2 // 2, c2), y2.shape
    assert jnp.allclose(y2, y2_ref), "Pallas maxpool (NHWC native) mismatch"

    print("KERNEL_OK")
</pallas_src>

<mosaic_0001>
module attributes {stable_mosaic.version = 11 : i64} {
  func.func @_maxpool2x2_kernel(%arg0: i32, %arg1: i32, %arg2: memref<1x8x2x8x8xf32, #tpu.memory_space<vmem>>, %arg3: memref<1x8x8x4xf32, #tpu.memory_space<vmem>>) attributes {dimension_semantics = [#tpu.dimension_semantics<parallel>, #tpu.dimension_semantics<parallel>], iteration_bounds = array<i64: 2, 1>, scalar_prefetch = 0 : i64, scratch_operands = 0 : i64, tpu.core_type = #tpu.core_type<tc>, window_params = [{transform_indices = @transform_0, window_bounds = array<i64: 1, 8, 2, 8, 8>}, {transform_indices = @transform_1, window_bounds = array<i64: 1, 8, 8, 4>}]} {
    %c0 = arith.constant 0 : index
    %c0_0 = arith.constant 0 : index
    %c0_1 = arith.constant 0 : index
    %c0_2 = arith.constant 0 : index
    %c0_3 = arith.constant 0 : index
    %0 = vector.load %arg2[%c0, %c0_0, %c0_1, %c0_2, %c0_3] : memref<1x8x2x8x8xf32, #tpu.memory_space<vmem>>, vector<1x8x1x8x8xf32>
    %1 = vector.shape_cast %0 : vector<1x8x1x8x8xf32> to vector<8x8x8xf32>
    %2 = vector.extract_strided_slice %1 {offsets = [0, 0, 0], sizes = [8, 8, 4], strides = [1, 1, 1]} : vector<8x8x8xf32> to vector<8x8x4xf32>
    %3 = vector.extract_strided_slice %1 {offsets = [0, 0, 4], sizes = [8, 8, 4], strides = [1, 1, 1]} : vector<8x8x8xf32> to vector<8x8x4xf32>
    %4 = arith.maximumf %2, %3 : vector<8x8x4xf32>
    %c0_4 = arith.constant 0 : index
    %c0_5 = arith.constant 0 : index
    %c1 = arith.constant 1 : index
    %c0_6 = arith.constant 0 : index
    %c0_7 = arith.constant 0 : index
    %5 = vector.load %arg2[%c0_4, %c0_5, %c1, %c0_6, %c0_7] : memref<1x8x2x8x8xf32, #tpu.memory_space<vmem>>, vector<1x8x1x8x8xf32>
    %6 = vector.shape_cast %5 : vector<1x8x1x8x8xf32> to vector<8x8x8xf32>
    %7 = vector.extract_strided_slice %6 {offsets = [0, 0, 0], sizes = [8, 8, 4], strides = [1, 1, 1]} : vector<8x8x8xf32> to vector<8x8x4xf32>
    %8 = vector.extract_strided_slice %6 {offsets = [0, 0, 4], sizes = [8, 8, 4], strides = [1, 1, 1]} : vector<8x8x8xf32> to vector<8x8x4xf32>
    %9 = arith.maximumf %7, %8 : vector<8x8x4xf32>
    %10 = arith.maximumf %4, %9 : vector<8x8x4xf32>
    %c0_8 = arith.constant 0 : index
    %c0_9 = arith.constant 0 : index
    %c0_10 = arith.constant 0 : index
    %c0_11 = arith.constant 0 : index
    %11 = vector.load %arg3[%c0_8, %c0_9, %c0_10, %c0_11] : memref<1x8x8x4xf32, #tpu.memory_space<vmem>>, vector<1x8x8x4xf32>
    %12 = vector.shape_cast %11 : vector<1x8x8x4xf32> to vector<8x8x4xf32>
    %13 = vector.shape_cast %10 : vector<8x8x4xf32> to vector<1x8x8x4xf32>
    tpu.vector_store %arg3[%c0_8, %c0_9, %c0_10, %c0_11], %13 {strides = array<i32>} : memref<1x8x8x4xf32, #tpu.memory_space<vmem>>, vector<1x8x8x4xf32>,
    return
  }
  func.func @transform_0(%arg0: i32, %arg1: i32) -> (i32, i32, i32, i32, i32) {
    %c0_i32 = arith.constant 0 : i32
    %c0_i32_0 = arith.constant 0 : i32
    %c0_i32_1 = arith.constant 0 : i32
    %c0_i32_2 = arith.constant 0 : i32
    return %arg0, %arg1, %c0_i32, %c0_i32_0, %c0_i32_1 : i32, i32, i32, i32, i32
  }
  func.func @transform_1(%arg0: i32, %arg1: i32) -> (i32, i32, i32, i32) {
    %c0_i32 = arith.constant 0 : i32
    %c0_i32_0 = arith.constant 0 : i32
    %c0_i32_1 = arith.constant 0 : i32
    return %arg0, %arg1, %c0_i32, %c0_i32_0 : i32, i32, i32, i32
  }
}

</mosaic_0001>

<llo_original>
// kernel: tpu_custom_call.1
$region0: #{tpu_custom_call.1}
  #allocation0 [shape = 'u32[]', space=smem, size = 0x4, offset = 0x4, fixed_abs, tag = 'smem constant byte address 0x4 - core index']
  #allocation1 [shape = 'u32[72,128]{1,0:T(1,128)}', space=vmem, size = 0x9000, scoped, tag = 'internal scratch']
  %s0 = inlined_call_operand.hbm [shape: f32[2,8,2,8,8], index: 0, kind: input, shape index: {}]
  %s1 = inlined_call_operand.vmem [shape: f32[2,8,8,4], index: 1, kind: output, shape index: {}]
  %s2 = sld [smem:[#allocation0]]
  $region41: #{tpu_custom_call.1} parent=0
    _
  %s4 = ssub.s32 1, %s2
  %s5 = scalar_select 0, %s4, %s2
  $region1: #{tpu_custom_call.1} parent=0
    #allocation2 [shape = 'u8[131072]{0}', space=vmem, size = 0x20000, scoped, tag = 'input window, operand 0']
    #allocation3 [shape = 's32[2]{0}', space=sflag, size = 0x8, scoped, tag = 'scoped memory for tpu_custom_call.1']
    %6 = vsyncpa [#allocation3], 0
    %s7 = scalar_lea.sflag [#allocation3], 1
    %8 = vsyncpa %s7, 0
    loop: start=0, step=1, limit=4
    $region2: #{tpu_custom_call.1} parent=1 // loop_pre_header
      _
    $region3: #{tpu_custom_call.1} parent=1 // loop_header
      %s10 = sphi 0, %s14
      %p11 = scmp.ge.s32.totalorder %s10, 4
      %s17 = sphi 0, %s29
      %s18 = sphi 0, %s25
      %s19 = sphi 0, %s17
      %s20 = sphi 0, %s18
      %s21 = sphi 0, %s19
      %s22 = sphi 0, %s20
      %s34 = sphi 0, %s36
      %s37 = sphi 0, %s34
      %s38 = sphi 0, %s37
      %s54 = sphi 0, %s38
      %s62 = sphi 0, %s64
      %s65 = sphi 0, %s62
      %s66 = sphi 0, %s65
      %s82 = sphi 0, %s66
    $region4: #{tpu_custom_call.1} parent=1 // loop_header_branch
      %13 = sbr.rel (%p11) target = $region8
    $region5: #{tpu_custom_call.1} parent=1 // loop_body
      %s15 = ssub.s32 %s10, 1
      %s16 = ssub.s32 %s10, 2
      %s23 = sadd.s32 1, %s18
      %p24 = scmp.ge.s32.totalorder %s23, 1
      %s25 = scalar_select %p24, 0, %s23
      %s26 = sadd.s32 1, %s17
      %s27 = scalar_select %p24, %s26, %s17
      %p28 = scmp.ge.s32.totalorder %s27, 2
      %s29 = scalar_select %p28, 0, %s27
      %s30 = ssub.s32 %s17, %s29
      %s31 = ssub.s32 %s18, %s25
      %s32 = sor.u32 %s30, %s31
      %p33 = scmp.eq.s32.totalorder %s32, 0
      %s35 = sadd.s32 %s34, 1
      %s36 = scalar_select %p33, %s34, %s35
      %p39 = pneg %p33
      %p40 = scmp.eq.s32.totalorder %s10, 1
      %p41 = por %p39, %p40
      %p42 = scmp.ne.s32.totalorder %s34, %s37
      %p43 = scmp.eq.s32.totalorder %s10, 0
      %p44 = por %p42, %p43
      %p45 = scmp.ne.s32.totalorder %s34, %s37
      %p46 = scmp.eq.s32.totalorder %s15, 1
      %p47 = por %p45, %p46
      %p48 = scmp.ne.s32.totalorder %s37, %s38
      %p49 = scmp.eq.s32.totalorder %s15, 0
      %p50 = por %p48, %p49
      %p51 = scmp.ne.s32.totalorder %s37, %s38
      %p52 = scmp.eq.s32.totalorder %s16, 1
      %p53 = por %p51, %p52
      %p55 = scmp.ne.s32.totalorder %s38, %s54
      %p56 = scmp.eq.s32.totalorder %s16, 0
      %p57 = por %p55, %p56
      %s58 = ssub.s32 %s17, %s29
      %s59 = ssub.s32 %s18, %s25
      %s60 = sor.u32 %s58, %s59
      %p61 = scmp.eq.s32.totalorder %s60, 0
      %s63 = sadd.s32 %s62, 1
      %s64 = scalar_select %p61, %s62, %s63
      %p67 = pneg %p61
      %p68 = scmp.eq.s32.totalorder %s10, 1
      %p69 = por %p67, %p68
      %p70 = scmp.ne.s32.totalorder %s62, %s65
      %p71 = scmp.eq.s32.totalorder %s10, 0
      %p72 = por %p70, %p71
      %p73 = scmp.ne.s32.totalorder %s62, %s65
      %p74 = scmp.eq.s32.totalorder %s15, 1
      %p75 = por %p73, %p74
      %p76 = scmp.ne.s32.totalorder %s65, %s66
      %p77 = scmp.eq.s32.totalorder %s15, 0
      %p78 = por %p76, %p77
      %p79 = scmp.ne.s32.totalorder %s65, %s66
      %p80 = scmp.eq.s32.totalorder %s16, 1
      %p81 = por %p79, %p80
      %p83 = scmp.ne.s32.totalorder %s66, %s82
      %p84 = scmp.eq.s32.totalorder %s16, 0
      %p85 = por %p83, %p84
      %p86 = scmp.le.s32.totalorder 1, %s10
      %p87 = scmp.lt.s32.totalorder %s10, 3
      %p88 = pnand %p86, %p87
      %p89 = pneg %p88
      // Predicated region
      $region9: #{tpu_custom_call.1} parent=5 // pred_check
        _
      $region10: #{tpu_custom_call.1} parent=5 // pred_check_branch
        %91 = sbr.rel (%p88) target = $region12
      $region11: #{tpu_custom_call.1} parent=5 // pred_region
        %s92 = ssub.s32 %s10, 1
      $region12: #{tpu_custom_call.1} parent=5 // pred_fallthru
        _
      %p93 = scmp.lt.s32.totalorder %s10, 2
      // Predicated region
      $region13: #{tpu_custom_call.1} parent=5 // pred_check
        %p94 = pneg %p93
      $region14: #{tpu_custom_call.1} parent=5 // pred_check_branch
        %96 = sbr.rel (%p94) target = $region16
      $region15: #{tpu_custom_call.1} parent=5 // pred_region
        // Predicated region
        $region17: #{tpu_custom_call.1} parent=15 // pred_check
          %p97 = pneg %p44
        $region18: #{tpu_custom_call.1} parent=15 // pred_check_branch
          %99 = sbr.rel (%p97) target = $region20
        $region19: #{tpu_custom_call.1} parent=15 // pred_region
          %s100 = sand.u32 %s34, 1
          %s101 = scalar_lea.sflag [#allocation3], %s100
          %s102 = sand.u32 %s34, 1
          %s103 = smul.addr %s102, 128
          %s104 = scalar_lea.vmem [#allocation2], %s103
          %s105 = smul.u32 8, %s18
          %107 = vsyncadd %s101, 0
          %s108 = smul.addr %s105, 2
          %s109 = smul.addr %s17, 16
          %s110 = sadd.s32 %s108, %s109
          %s111 = smul.addr %s110, 8
          %s112 = scalar_lea.hbm %s0, %s111
          %s113 = sshll.u32 %s112, 4
          %s114 = int_to_ptr.hbm [resolvable:$true] %s113
          %s115 = sshll.u32 %s104, 4
          %s116 = int_to_ptr.vmem [resolvable:$true] %s115
          %121 = dma.hbm_to_vmem [thread:$0]  %s114, 2048, %s116, %s101, 128, 128, 8
        $region20: #{tpu_custom_call.1} parent=15 // pred_fallthru
          _
      $region16: #{tpu_custom_call.1} parent=5 // pred_fallthru
        _
      %p122 = scmp.le.s32.totalorder 1, %s10
      %p123 = scmp.lt.s32.totalorder %s10, 3
      %p124 = pnand %p122, %p123
      %p125 = pneg %p124
      // Predicated region
      $region21: #{tpu_custom_call.1} parent=5 // pred_check
        _
      $region22: #{tpu_custom_call.1} parent=5 // pred_check_branch
        %127 = sbr.rel (%p124) target = $region24
      $region23: #{tpu_custom_call.1} parent=5 // pred_region
        %s128 = ssub.s32 %s10, 1
        %s129 = sand.u32 %s37, 1
        %s130 = scalar_lea.sflag [#allocation3], %s129
        %s131 = sand.u32 %s37, 1
        %s132 = smul.addr %s131, 128
        %s133 = scalar_lea.vmem [#allocation2], %s132
        // Predicated region
        $region25: #{tpu_custom_call.1} parent=23 // pred_check
          %p134 = pneg %p50
        $region26: #{tpu_custom_call.1} parent=23 // pred_check_branch
          %136 = sbr.rel (%p134) target = $region28
        $region27: #{tpu_custom_call.1} parent=23 // pred_region
          %138 = dma.done %s130, 2048
        $region28: #{tpu_custom_call.1} parent=23 // pred_fallthru
          _
        %s139 = sand.u32 %s37, 1
        %s140 = scalar_lea.sflag [#allocation3], %s139
        %s141 = sand.u32 %s37, 1
        %s142 = smul.addr %s141, 128
        %s143 = scalar_lea.vmem [#allocation2], %s142
        %p144 = pneg %p50
        %p145 = pneg %p47
        %p146 = pneg %p78
        %p147 = pneg %p75
        %s148 = smul.u32 8, %s20
        %p149 = scmp.lt.s32.totalorder %s19, 1
        %s150 = scalar_select %p149, %s19, 1
        %p151 = scmp.lt.s32.totalorder %s148, 7
        %s152 = scalar_select %p151, %s148, 7
        %s153 = smul.addr %s150, 8
        %s154 = sadd.s32 %s152, %s153
        %s155 = smul.addr %s154, 8
        %s156 = scalar_lea.vmem %s1, %s155
        %s157 = smul.u32 8, %s20
        %s158 = smul.u32 8, %s20
        %p159 = scmp.lt.s32.totalorder %s19, 1
        %s160 = scalar_select %p159, %s19, 1
        %p161 = scmp.lt.s32.totalorder %s158, 7
        %s162 = scalar_select %p161, %s158, 7
        %s163 = smul.addr %s160, 8
        %s164 = sadd.s32 %s162, %s163
        %s165 = smul.addr %s164, 8
        %s166 = scalar_lea.vmem %s1, %s165
        %s167 = smul.u32 8, %s20
        %v168 = vld [vmem:[%s133] sm:$0xff]
        %v169 = vld [vmem:[%s133 + $0x10] sm:$0xff]
        %v170 = vld [vmem:[%s133 + $0x20] sm:$0xff]
        %v171 = vld [vmem:[%s133 + $0x30] sm:$0xff]
        %v172 = vld [vmem:[%s133 + $0x40] sm:$0xff]
        %v173 = vld [vmem:[%s133 + $0x50] sm:$0xff]
        %v174 = vld [vmem:[%s133 + $0x60] sm:$0xff]
        %v175 = vld [vmem:[%s133 + $0x70] sm:$0xff]
        %184 = vrot.lane.b32.xlu0 %v168, 124
        %v185 = vpop.permute.xlu0 %184
        %186 = vrot.lane.b32.xlu0 %v169, 124
        %v187 = vpop.permute.xlu0 %186
        %188 = vrot.lane.b32.xlu0 %v170, 124
        %v189 = vpop.permute.xlu0 %188
        %190 = vrot.lane.b32.xlu0 %v171, 124
        %v191 = vpop.permute.xlu0 %190
        %192 = vrot.lane.b32.xlu0 %v172, 124
        %v193 = vpop.permute.xlu0 %192
        %194 = vrot.lane.b32.xlu0 %v173, 124
        %v195 = vpop.permute.xlu0 %194
        %196 = vrot.lane.b32.xlu0 %v174, 124
        %v197 = vpop.permute.xlu0 %196
        %198 = vrot.lane.b32.xlu0 %v175, 124
        %v199 = vpop.permute.xlu0 %198
        %v208 = vmax.f32 %v168, %v185
        %v209 = vmax.f32 %v169, %v187
        %v210 = vmax.f32 %v170, %v189
        %v211 = vmax.f32 %v171, %v191
        %v212 = vmax.f32 %v172, %v193
        %v213 = vmax.f32 %v173, %v195
        %v214 = vmax.f32 %v174, %v197
        %v215 = vmax.f32 %v175, %v199
        %s216 = scalar_lea.vmem %s133, 8 [#allocation2]
        %v217 = vld [vmem:[%s216] sm:$0xff]
        %v218 = vld [vmem:[%s216 + $0x10] sm:$0xff]
        %v219 = vld [vmem:[%s216 + $0x20] sm:$0xff]
        %v220 = vld [vmem:[%s216 + $0x30] sm:$0xff]
        %v221 = vld [vmem:[%s216 + $0x40] sm:$0xff]
        %v222 = vld [vmem:[%s216 + $0x50] sm:$0xff]
        %v223 = vld [vmem:[%s216 + $0x60] sm:$0xff]
        %v224 = vld [vmem:[%s216 + $0x70] sm:$0xff]
        %233 = vrot.lane.b32.xlu0 %v217, 124
        %v234 = vpop.permute.xlu0 %233
        %235 = vrot.lane.b32.xlu0 %v218, 124
        %v236 = vpop.permute.xlu0 %235
        %237 = vrot.lane.b32.xlu0 %v219, 124
        %v238 = vpop.permute.xlu0 %237
        %239 = vrot.lane.b32.xlu0 %v220, 124
        %v240 = vpop.permute.xlu0 %239
        %241 = vrot.lane.b32.xlu0 %v221, 124
        %v242 = vpop.permute.xlu0 %241
        %243 = vrot.lane.b32.xlu0 %v222, 124
        %v244 = vpop.permute.xlu0 %243
        %245 = vrot.lane.b32.xlu0 %v223, 124
        %v246 = vpop.permute.xlu0 %245
        %247 = vrot.lane.b32.xlu0 %v224, 124
        %v248 = vpop.permute.xlu0 %247
        %v257 = vmax.f32 %v217, %v234
        %v258 = vmax.f32 %v218, %v236
        %v259 = vmax.f32 %v219, %v238
        %v260 = vmax.f32 %v220, %v240
        %v261 = vmax.f32 %v221, %v242
        %v262 = vmax.f32 %v222, %v244
        %v263 = vmax.f32 %v223, %v246
        %v264 = vmax.f32 %v224, %v248
        %v265 = vmax.f32 %v208, %v257
        %v266 = vmax.f32 %v209, %v258
        %v267 = vmax.f32 %v210, %v259
        %v268 = vmax.f32 %v211, %v260
        %v269 = vmax.f32 %v212, %v261
        %v270 = vmax.f32 %v213, %v262
        %v271 = vmax.f32 %v214, %v263
        %v272 = vmax.f32 %v215, %v264
        %vm273 = vcmask 31744
        %274 = vst.msk [vmem:[%s166] sm:$0xff] %vm273, %v265
        %275 = vst.msk [vmem:[%s166 + $0x8] sm:$0xff] %vm273, %v266
        %276 = vst.msk [vmem:[%s166 + $0x10] sm:$0xff] %vm273, %v267
        %277 = vst.msk [vmem:[%s166 + $0x18] sm:$0xff] %vm273, %v268
        %278 = vst.msk [vmem:[%s166 + $0x20] sm:$0xff] %vm273, %v269
        %279 = vst.msk [vmem:[%s166 + $0x28] sm:$0xff] %vm273, %v270
        %280 = vst.msk [vmem:[%s166 + $0x30] sm:$0xff] %vm273, %v271
        %281 = vst.msk [vmem:[%s166 + $0x38] sm:$0xff] %vm273, %v272
        %s282 = smul.u32 8, %s20
        %p283 = scmp.lt.s32.totalorder %s19, 1
        %s284 = scalar_select %p283, %s19, 1
        %p285 = scmp.lt.s32.totalorder %s282, 7
        %s286 = scalar_select %p285, %s282, 7
        %s287 = smul.addr %s284, 8
        %s288 = sadd.s32 %s286, %s287
        %s289 = smul.addr %s288, 8
        %s290 = scalar_lea.vmem %s1, %s289
        // Predicated region
        $region29: #{tpu_custom_call.1} parent=23 // pred_check
          %p291 = pneg %p75
        $region30: #{tpu_custom_call.1} parent=23 // pred_check_branch
          %293 = sbr.rel (%p291) target = $region32
        $region31: #{tpu_custom_call.1} parent=23 // pred_region
          %s294 = smul.u32 8, %s20
        $region32: #{tpu_custom_call.1} parent=23 // pred_fallthru
          _
      $region24: #{tpu_custom_call.1} parent=5 // pred_fallthru
        _
      %p295 = scmp.le.s32.totalorder 2, %s10
      // Predicated region
      $region33: #{tpu_custom_call.1} parent=5 // pred_check
        %p296 = pneg %p295
      $region34: #{tpu_custom_call.1} parent=5 // pred_check_branch
        %298 = sbr.rel (%p296) target = $region36
      $region35: #{tpu_custom_call.1} parent=5 // pred_region
        %s299 = ssub.s32 %s10, 2
        // Predicated region
        $region37: #{tpu_custom_call.1} parent=35 // pred_check
          %p300 = pneg %p81
        $region38: #{tpu_custom_call.1} parent=35 // pred_check_branch
          %302 = sbr.rel (%p300) target = $region40
        $region39: #{tpu_custom_call.1} parent=35 // pred_region
          %s303 = smul.u32 8, %s22
          %p304 = scmp.lt.s32.totalorder %s21, 1
          %s305 = scalar_select %p304, %s21, 1
          %p306 = scmp.lt.s32.totalorder %s303, 7
          %s307 = scalar_select %p306, %s303, 7
          %s308 = smul.addr %s305, 8
          %s309 = sadd.s32 %s307, %s308
          %s310 = smul.addr %s309, 8
          %s311 = scalar_lea.vmem %s1, %s310
        $region40: #{tpu_custom_call.1} parent=35 // pred_fallthru
          _
      $region36: #{tpu_custom_call.1} parent=5 // pred_fallthru
        _
    $region6: #{tpu_custom_call.1} parent=1 // loop_footer
      %s14 = sadd.s32 1, %s10
    $region7: #{tpu_custom_call.1} parent=1 // loop_footer_branch
      %9 = sbr.rel target = $region3
    $region8: #{tpu_custom_call.1} parent=1 // loop_exit
      _
    %312 = vsyncpa [#allocation3], 1
    %s313 = scalar_lea.sflag [#allocation3], 1
    %314 = vsyncpa %s313, 1

</llo_original>
